<compile_context>
chip_gen: v7x
topology: tpu7x:2x2x1
jax: 0.10.0
libtpu: 0.0.40
codegen_flags: <defaults>
</compile_context>

<pallas_src>
import jax
import jax.numpy as jnp
from jax.experimental import pallas as pl
from jax.experimental.pallas import tpu as pltpu


_NEG_BIG = -1e30  # effective -inf for padded vocab lanes (avoids inf-inf NaN paths)


def _round_up(x, m):
    return ((x + m - 1) // m) * m


# ---------------------------------------------------------------------------
# Fused single-pass kernel: whole (padded) vocab fits one lane tile.
# ---------------------------------------------------------------------------
def _mlm_fused_kernel(x_ref, wt_ref, b_ref, o_ref):
    # x: (TM, H) bf16 ; wt: (H, Vp) bf16 ; b: (1, Vp) f32 ; o: (TM, Vp) block of (rows, V)
    z = jnp.dot(x_ref[...], wt_ref[...], preferred_element_type=jnp.float32)
    z = z + b_ref[...]
    m = jnp.max(z, axis=-1, keepdims=True)
    s = z - m
    lse = jnp.log(jnp.sum(jnp.exp(s), axis=-1, keepdims=True))
    o_ref[...] = (s - lse).astype(o_ref.dtype)


# ---------------------------------------------------------------------------
# Tiled-vocab pass 1: matmul + online logsumexp; emits bf16 raw logits + per-row lse.
# ---------------------------------------------------------------------------
def _mlm_logits_lse_kernel(x_ref, wt_ref, b_ref, z_ref, lse_ref, m_sc, l_sc):
    j = pl.program_id(1)

    @pl.when(j == 0)
    def _():
        m_sc[...] = jnp.full(m_sc.shape, -jnp.inf, dtype=m_sc.dtype)
        l_sc[...] = jnp.zeros(l_sc.shape, dtype=l_sc.dtype)

    z = jnp.dot(x_ref[...], wt_ref[...], preferred_element_type=jnp.float32)
    z = z + b_ref[...]
    z_ref[...] = z.astype(z_ref.dtype)        # bf16 stash; stats below stay f32

    m_new = jnp.maximum(m_sc[...], jnp.max(z, axis=-1, keepdims=True))
    l_sc[...] = l_sc[...] * jnp.exp(m_sc[...] - m_new) + jnp.sum(
        jnp.exp(z - m_new), axis=-1, keepdims=True)
    m_sc[...] = m_new

    @pl.when(j == pl.num_programs(1) - 1)
    def _():
        lse_ref[...] = m_sc[...] + jnp.log(l_sc[...])


# ---------------------------------------------------------------------------
# Tiled-vocab pass 2: cheap elementwise finalize, out = logits - lse.
# ---------------------------------------------------------------------------
def _mlm_normalize_kernel(z_ref, lse_ref, o_ref):
    o_ref[...] = (z_ref[...].astype(jnp.float32) - lse_ref[...]).astype(o_ref.dtype)


# ---------------------------------------------------------------------------
# One-time parameter preparation (call once, not per forward).
# ---------------------------------------------------------------------------
def prepare_mlm_params(weight, bias, *, tv=2048):
    """
    weight: [V, H] f32 (PyTorch nn.Linear layout), bias: [V] f32.
    Pads vocab to the lane-tile multiple, transposes to (H, Vp), casts the matmul
    operand to bf16.  Padded vocab lanes get a -1e30 bias so they never win the max
    or contribute to the exp-sum.
    """
    V, H = weight.shape
    tv_eff = min(_round_up(max(tv, 128), 128), _round_up(V, 128))
    v_pad = _round_up(V, tv_eff)
    w = weight
    b = bias.astype(jnp.float32)
    if v_pad != V:
        w = jnp.pad(w, ((0, v_pad - V), (0, 0)))
        b = jnp.pad(b, (0, v_pad - V), constant_values=_NEG_BIG)
    w_t = jnp.transpose(w).astype(jnp.bfloat16)        # (H, v_pad)
    return dict(w_t=w_t, bias2d=b.reshape(1, v_pad), vocab=V, hidden=H,
                v_pad=v_pad, tv=tv_eff)


def _vmem_limit(nbytes):
    # generous headroom, but stay under v7x's 64 MiB physical VMEM
    return int(min(60 * 2**20, max(32 * 2**20, nbytes * 3 // 2)))


# ---------------------------------------------------------------------------
# Forward: log_softmax(x @ W.T + b, axis=-1)
# ---------------------------------------------------------------------------
def masked_language_model(x, params, *, tm=512, out_dtype=jnp.float32):
    """
    x:      [B, S, H] float32
    params: output of prepare_mlm_params(weight [V,H], bias [V])
    returns [B, S, V] log-probabilities (out_dtype, default float32)
    """
    B, S, H = x.shape
    assert H == params["hidden"]
    V, v_pad, tv = params["vocab"], params["v_pad"], params["tv"]
    w_t, b2 = params["w_t"], params["bias2d"]
    rows = B * S
    n_v_tiles = v_pad // tv

    # Row tile: multiple of 8 (sublane), clamped to the padded row count.
    tm = _round_up(max(tm, 8), 8)
    tm_eff = min(tm, _round_up(rows, 8))
    rows_pad = _round_up(rows, tm_eff)
    n_row_tiles = rows_pad // tm_eff

    # Activations: flatten, pad rows (cheap), cast matmul operand to bf16.
    x2 = x.reshape(rows, H)
    if rows_pad != rows:
        x2 = jnp.pad(x2, ((0, rows_pad - rows), (0, 0)))
    x2 = x2.astype(jnp.bfloat16)

    if n_v_tiles == 1:
        # Whole (padded) vocab fits one lane tile: fused one-pass kernel.
        fp = (2 * tm_eff * H * 2 + 2 * v_pad * H * 2 + 2 * v_pad * 4
              + 2 * tm_eff * v_pad * 4)
        out = pl.pallas_call(
            _mlm_fused_kernel,
            out_shape=jax.ShapeDtypeStruct((rows, V), out_dtype),
            grid_spec=pltpu.PrefetchScalarGridSpec(
                num_scalar_prefetch=0,
                grid=(n_row_tiles,),
                in_specs=[
                    pl.BlockSpec((tm_eff, H), lambda i: (i, 0)),     # x row tile
                    pl.BlockSpec((H, v_pad), lambda i: (0, 0)),      # full W^T (fetched once)
                    pl.BlockSpec((1, v_pad), lambda i: (0, 0)),      # bias
                ],
                out_specs=pl.BlockSpec((tm_eff, v_pad), lambda i: (i, 0)),
            ),
            compiler_params=pltpu.CompilerParams(
                dimension_semantics=("parallel",),
                vmem_limit_bytes=_vmem_limit(fp),
            ),
        )(x2, w_t, b2)
    else:
        # Pass 1: matmul + online logsumexp over vocab tiles; bf16 raw logits.
        fp1 = (2 * tm_eff * H * 2 + 2 * tv * H * 2 + 2 * tv * 4
               + 2 * tm_eff * tv * 2 + 3 * 2 * tm_eff * 128 * 4)
        z_logits, lse = pl.pallas_call(
            _mlm_logits_lse_kernel,
            out_shape=(
                jax.ShapeDtypeStruct((rows, V), jnp.bfloat16),       # raw logits (bf16)
                jax.ShapeDtypeStruct((rows, 1), jnp.float32),        # per-row lse
            ),
            grid_spec=pltpu.PrefetchScalarGridSpec(
                num_scalar_prefetch=0,
                grid=(n_row_tiles, n_v_tiles),
                in_specs=[
                    pl.BlockSpec((tm_eff, H), lambda i, j: (i, 0)),  # x row tile
                    pl.BlockSpec((H, tv), lambda i, j: (0, j)),      # W^T vocab tile
                    pl.BlockSpec((1, tv), lambda i, j: (0, j)),      # bias vocab tile
                ],
                out_specs=(
                    pl.BlockSpec((tm_eff, tv), lambda i, j: (i, j)),
                    pl.BlockSpec((tm_eff, 1), lambda i, j: (i, 0)),
                ),
                scratch_shapes=[
                    pltpu.VMEM((tm_eff, 1), jnp.float32),            # running max
                    pltpu.VMEM((tm_eff, 1), jnp.float32),            # running sum(exp)
                ],
            ),
            compiler_params=pltpu.CompilerParams(
                dimension_semantics=("parallel", "arbitrary"),
                vmem_limit_bytes=_vmem_limit(fp1),
            ),
        )(x2, w_t, b2)

        # Pass 2: normalize (bf16 logits -> out_dtype log-probs), fully parallel.
        fp2 = 2 * tm_eff * tv * 2 + 2 * tm_eff * 128 * 4 + 2 * tm_eff * tv * 4
        out = pl.pallas_call(
            _mlm_normalize_kernel,
            out_shape=jax.ShapeDtypeStruct((rows, V), out_dtype),
            grid_spec=pltpu.PrefetchScalarGridSpec(
                num_scalar_prefetch=0,
                grid=(n_row_tiles, n_v_tiles),
                in_specs=[
                    pl.BlockSpec((tm_eff, tv), lambda i, j: (i, j)),
                    pl.BlockSpec((tm_eff, 1), lambda i, j: (i, 0)),
                ],
                out_specs=pl.BlockSpec((tm_eff, tv), lambda i, j: (i, j)),
            ),
            compiler_params=pltpu.CompilerParams(
                dimension_semantics=("parallel", "parallel"),
                vmem_limit_bytes=_vmem_limit(fp2),
            ),
        )(z_logits, lse)

    return out.reshape(B, S, V)


if __name__ == "__main__":
    key = jax.random.PRNGKey(0)
    k1, k2, k3, k4, k5, k6 = jax.random.split(key, 6)

    # Case 1: small BERT-head shapes, single vocab tile (fused kernel path).
    batch, seq, hidden, vocab = 2, 8, 32, 128
    bound = 1.0 / (hidden ** 0.5)
    x = jax.random.normal(k1, (batch, seq, hidden), dtype=jnp.float32)
    weight = jax.random.uniform(k2, (vocab, hidden), minval=-bound, maxval=bound,
                                dtype=jnp.float32)
    bias = jax.random.uniform(k3, (vocab,), minval=-bound, maxval=bound,
                              dtype=jnp.float32)

    params = prepare_mlm_params(weight, bias)              # one-time parameter prep
    out = jax.block_until_ready(masked_language_model(x, params))
    ref = jax.nn.log_softmax(x @ weight.T + bias, axis=-1)
    assert out.shape == (batch, seq, vocab)
    err = float(jnp.max(jnp.abs(out - ref)))
    assert jnp.allclose(out, ref, atol=3e-2, rtol=3e-2), err

    # Case 2: ragged shapes + forced vocab tiling (two-pass online-logsumexp path).
    batch2, seq2, hidden2, vocab2 = 2, 5, 32, 300          # rows=10 (not %8), V=300 (not %128)
    bound2 = 1.0 / (hidden2 ** 0.5)
    x_b = jax.random.normal(k4, (batch2, seq2, hidden2), dtype=jnp.float32)
    w_b = jax.random.uniform(k5, (vocab2, hidden2), minval=-bound2, maxval=bound2,
                             dtype=jnp.float32)
    b_b = jax.random.uniform(k6, (vocab2,), minval=-bound2, maxval=bound2,
                             dtype=jnp.float32)

    params2 = prepare_mlm_params(w_b, b_b, tv=128)         # 3 vocab tiles
    out2 = jax.block_until_ready(masked_language_model(x_b, params2, tm=8))  # 2 row tiles
    ref2 = jax.nn.log_softmax(x_b @ w_b.T + b_b, axis=-1)
    assert out2.shape == (batch2, seq2, vocab2)
    err2 = float(jnp.max(jnp.abs(out2 - ref2)))
    assert jnp.allclose(out2, ref2, atol=3e-2, rtol=3e-2), err2

    print("KERNEL_OK")
</pallas_src>

<mosaic_0001>
module attributes {stable_mosaic.version = 11 : i64} {
  func.func @_mlm_fused_kernel(%arg0: i32, %arg1: memref<16x32xbf16, #tpu.memory_space<vmem>>, %arg2: memref<32x128xbf16, #tpu.memory_space<vmem>>, %arg3: memref<1x128xf32, #tpu.memory_space<vmem>>, %arg4: memref<16x128xf32, #tpu.memory_space<vmem>>) attributes {dimension_semantics = [#tpu.dimension_semantics<parallel>], iteration_bounds = array<i64: 1>, scalar_prefetch = 0 : i64, scratch_operands = 0 : i64, tpu.core_type = #tpu.core_type<tc>, window_params = [{transform_indices = @transform_0, window_bounds = array<i64: 16, 32>}, {pipeline_mode = #tpu.pipeline_mode<synchronous>, transform_indices = @transform_1, window_bounds = array<i64: 32, 128>}, {pipeline_mode = #tpu.pipeline_mode<synchronous>, transform_indices = @transform_2, window_bounds = array<i64: 1, 128>}, {transform_indices = @transform_3, window_bounds = array<i64: 16, 128>}]} {
    %c0 = arith.constant 0 : index
    %c0_0 = arith.constant 0 : index
    %0 = vector.load %arg1[%c0, %c0_0] : memref<16x32xbf16, #tpu.memory_space<vmem>>, vector<16x32xbf16>
    %c0_1 = arith.constant 0 : index
    %c0_2 = arith.constant 0 : index
    %1 = vector.load %arg2[%c0_1, %c0_2] : memref<32x128xbf16, #tpu.memory_space<vmem>>, vector<32x128xbf16>
    %cst = arith.constant dense<0.000000e+00> : vector<16x128xf32>
    %2 = tpu.matmul %0, %1, %cst {dimension_numbers = #tpu.dot_dimension_numbers<[1], [0], [0], [1], [0, 0, 1, 1], [], []>} : vector<16x32xbf16>, vector<32x128xbf16>, vector<16x128xf32> -> vector<16x128xf32>
    %c0_3 = arith.constant 0 : index
    %c0_4 = arith.constant 0 : index
    %3 = vector.load %arg3[%c0_3, %c0_4] : memref<1x128xf32, #tpu.memory_space<vmem>>, vector<1x128xf32>
    %4 = vector.broadcast %3 : vector<1x128xf32> to vector<16x128xf32>
    %5 = arith.addf %2, %4 : vector<16x128xf32>
    %cst_5 = arith.constant dense<0xFF800000> : vector<16xf32>
    %6 = vector.multi_reduction <maximumf>, %5, %cst_5 [1] : vector<16x128xf32> to vector<16xf32>
    %7 = vector.shape_cast %6 : vector<16xf32> to vector<16x1xf32>
    %8 = vector.broadcast %7 : vector<16x1xf32> to vector<16x128xf32>
    %9 = arith.subf %5, %8 : vector<16x128xf32>
    %10 = math.exp %9 : vector<16x128xf32>
    %cst_6 = arith.constant dense<0.000000e+00> : vector<16xf32>
    %11 = vector.multi_reduction <add>, %10, %cst_6 [1] : vector<16x128xf32> to vector<16xf32>
    %12 = vector.shape_cast %11 : vector<16xf32> to vector<16x1xf32>
    %13 = math.log %12 : vector<16x1xf32>
    %14 = vector.broadcast %13 : vector<16x1xf32> to vector<16x128xf32>
    %15 = arith.subf %9, %14 : vector<16x128xf32>
    %c0_7 = arith.constant 0 : index
    %c0_8 = arith.constant 0 : index
    %16 = vector.load %arg4[%c0_7, %c0_8] : memref<16x128xf32, #tpu.memory_space<vmem>>, vector<16x128xf32>
    tpu.vector_store %arg4[%c0_7, %c0_8], %15 {strides = array<i32>} : memref<16x128xf32, #tpu.memory_space<vmem>>, vector<16x128xf32>,
    return
  }
  func.func @transform_0(%arg0: i32) -> (i32, i32) {
    %c0_i32 = arith.constant 0 : i32
    %c0_i32_0 = arith.constant 0 : i32
    return %arg0, %c0_i32 : i32, i32
  }
  func.func @transform_1(%arg0: i32) -> (i32, i32) {
    %c0_i32 = arith.constant 0 : i32
    %c0_i32_0 = arith.constant 0 : i32
    %c0_i32_1 = arith.constant 0 : i32
    return %c0_i32, %c0_i32_0 : i32, i32
  }
  func.func @transform_2(%arg0: i32) -> (i32, i32) {
    %c0_i32 = arith.constant 0 : i32
    %c0_i32_0 = arith.constant 0 : i32
    %c0_i32_1 = arith.constant 0 : i32
    return %c0_i32, %c0_i32_0 : i32, i32
  }
  func.func @transform_3(%arg0: i32) -> (i32, i32) {
    %c0_i32 = arith.constant 0 : i32
    %c0_i32_0 = arith.constant 0 : i32
    return %arg0, %c0_i32 : i32, i32
  }
}

</mosaic_0001>

<llo_original>
// kernel: tpu_custom_call.1
$region0: #{tpu_custom_call.1}
  #allocation0 [shape = 'u32[]', space=smem, size = 0x4, offset = 0x4, fixed_abs, tag = 'smem constant byte address 0x4 - core index']
  #allocation1 [shape = 'u32[144,128]{1,0:T(1,128)}', space=vmem, size = 0x12000, scoped, tag = 'internal scratch']
  %s0 = inlined_call_operand.hbm [shape: bf16[16,32], index: 0, kind: input, shape index: {}]
  %s1 = inlined_call_operand.hbm [shape: bf16[32,128], index: 1, kind: input, shape index: {}]
  %s2 = inlined_call_operand.vmem [shape: f32[1,128], index: 2, kind: input, shape index: {}]
  %s3 = inlined_call_operand.hbm [shape: f32[16,128], index: 3, kind: output, shape index: {}]
  %s4 = sld [smem:[#allocation0]]
  $region30: #{tpu_custom_call.1} parent=0
    _
  %s6 = ssub.s32 1, %s4
  %s7 = scalar_select 0, %s6, %s4
  $region1: #{tpu_custom_call.1} parent=0
    #allocation2 [shape = 'u8[4096]{0}', space=vmem, size = 0x1000, scoped, tag = 'input window, operand 0, single buffered']
    #allocation3 [shape = 's32[1]{0}', space=sflag, size = 0x4, scoped, tag = 'scoped memory for tpu_custom_call.1']
    #allocation4 [shape = 's32[1]{0}', space=sflag, size = 0x4, scoped, tag = 'scoped memory for tpu_custom_call.1']
    #allocation5 [shape = 'u8[8192]{0}', space=vmem, size = 0x2000, scoped, tag = 'input window, operand 1, single buffered']
    #allocation6 [shape = 's32[1]{0}', space=sflag, size = 0x4, scoped, tag = 'scoped memory for tpu_custom_call.1']
    #allocation7 [shape = 'u8[8192]{0}', space=vmem, size = 0x2000, scoped, tag = 'output window, operand 0, single buffered']
    %8 = vsyncpa [#allocation3], 0
    %9 = vsyncpa [#allocation6], 0
    %10 = vsyncpa [#allocation4], 0
    // Predicated region
    $region2: #{tpu_custom_call.1} parent=1 // pred_check
      _
    $region3: #{tpu_custom_call.1} parent=1 // pred_check_branch
      %12 = sbr.rel (0) target = $region5
    $region4: #{tpu_custom_call.1} parent=1 // pred_region
      %s14 = ssub.s32 128, 128
      %15 = vsyncadd [#allocation3], %s14
      %s16 = sshll.u32 [#allocation2], 4
      %s17 = int_to_ptr.vmem [resolvable:$true] %s16
      %22 = dma.hbm_to_vmem [thread:$0]  %s0, 128, %s17, [#allocation3], 64, 64, 4
    $region5: #{tpu_custom_call.1} parent=1 // pred_fallthru
      _
    // Predicated region
    $region6: #{tpu_custom_call.1} parent=1 // pred_check
      _
    $region7: #{tpu_custom_call.1} parent=1 // pred_check_branch
      %24 = sbr.rel (0) target = $region9
    $region8: #{tpu_custom_call.1} parent=1 // pred_region
      %s26 = ssub.s32 256, 256
      %27 = vsyncadd [#allocation6], %s26
      %s28 = sshll.u32 [#allocation5], 4
      %s29 = int_to_ptr.vmem [resolvable:$true] %s28
      %34 = dma.hbm_to_vmem [thread:$0]  %s1, 256, %s29, [#allocation6], 64, 64, 4
    $region9: #{tpu_custom_call.1} parent=1 // pred_fallthru
      _
    // Predicated region
    $region10: #{tpu_custom_call.1} parent=1 // pred_check
      _
    $region11: #{tpu_custom_call.1} parent=1 // pred_check_branch
      %36 = sbr.rel (0) target = $region13
    $region12: #{tpu_custom_call.1} parent=1 // pred_region
      _
    $region13: #{tpu_custom_call.1} parent=1 // pred_fallthru
      _
    // Predicated region
    $region14: #{tpu_custom_call.1} parent=1 // pred_check
      _
    $region15: #{tpu_custom_call.1} parent=1 // pred_check_branch
      %38 = sbr.rel (0) target = $region17
    $region16: #{tpu_custom_call.1} parent=1 // pred_region
      %39 = dma.done [#allocation3], 128
    $region17: #{tpu_custom_call.1} parent=1 // pred_fallthru
      _
    // Predicated region
    $region18: #{tpu_custom_call.1} parent=1 // pred_check
      _
    $region19: #{tpu_custom_call.1} parent=1 // pred_check_branch
      %41 = sbr.rel (0) target = $region21
    $region20: #{tpu_custom_call.1} parent=1 // pred_region
      %42 = dma.done [#allocation6], 256
    $region21: #{tpu_custom_call.1} parent=1 // pred_fallthru
      _
    %v44 = vld [vmem:[#allocation2] sm:$0xf]
    %v45 = vld [vmem:[#allocation2 + $0x4] sm:$0xf]
    %v46 = vld [vmem:[#allocation5] sm:$0xf]
    %v47 = vld [vmem:[#allocation5 + $0x4] sm:$0xf]
    %v48 = vld [vmem:[#allocation5 + $0x8] sm:$0xf]
    %v49 = vld [vmem:[#allocation5 + $0xc] sm:$0xf]
    %v50 = vld [vmem:[%s2] sm:$0x1]
    %v52 = vlaneseq
    %v53 = vshrl.u32 %v52, 7
    %v54 = vsub.s32 0, %v53
    %v55 = vrot.slane %v50, %v54
    %v59 = vunpack.c.l.b16 %v44
    %v60 = vunpack.c.l.b16 %v45
    %v61 = vpack.c.b16 %v60, %v59
    %v66 = vunpack.c.l.b16 %v46
    %v67 = vunpack.c.l.b16 %v47
    %v68 = vunpack.c.l.b16 %v48
    %v69 = vunpack.c.l.b16 %v49
    %v70 = vpack.c.b16 %v67, %v66
    %v71 = vpack.c.b16 %v69, %v68
    %vm74 = vcmask 261120
    %v76 = vsel %vm74, %v61, 0
    %78 = vmatprep.subr.bf16.mxu0 0
    %79 = vmatpush1.bf16.msra.mxu0 %v70
    %80 = vmatprep.subr.bf16.mxu0 0
    %81 = vmatpush1.bf16.msra.mxu0 %v71
    %82 = vmatprep.subr.bf16.mxu0 0
    %83 = vmatpush1.bf16.msra.mxu0 0
    %84 = vmatprep.subr.bf16.mxu0 0
    %85 = vmatpush1.bf16.msra.mxu0 0
    %86 = vmatprep.subr.bf16.mxu0 0
    %87 = vmatpush1.bf16.msra.mxu0 0
    %88 = vmatprep.subr.bf16.mxu0 0
    %89 = vmatpush1.bf16.msra.mxu0 0
    %90 = vmatprep.subr.bf16.mxu0 0
    %91 = vmatpush1.bf16.msra.mxu0 0
    %92 = vmatprep.subr.bf16.mxu0 0
    %93 = vmatpush1.bf16.msra.mxu0 0
    %94 = vmatprep.subr.bf16.mxu0 0
    %95 = vmatpush1.bf16.msra.mxu0 0
    %96 = vmatprep.subr.bf16.mxu0 0
    %97 = vmatpush1.bf16.msra.mxu0 0
    %98 = vmatprep.subr.bf16.mxu0 0
    %99 = vmatpush1.bf16.msra.mxu0 0
    %100 = vmatprep.subr.bf16.mxu0 0
    %101 = vmatpush1.bf16.msra.mxu0 0
    %102 = vmatprep.subr.bf16.mxu0 0
    %103 = vmatpush1.bf16.msra.mxu0 0
    %104 = vmatprep.subr.bf16.mxu0 0
    %105 = vmatpush1.bf16.msra.mxu0 0
    %106 = vmatprep.subr.bf16.mxu0 0
    %107 = vmatpush1.bf16.msra.mxu0 0
    %108 = vmatprep.subr.bf16.mxu0 0
    %109 = vmatpush1.bf16.msra.mxu0 0
    %110 = vmatprep.mubr.bf16.mxu0 0
    %111 = vmatmul.mubr.bf16.gmra.mrb[0].mxu0 %v76
    %v112 = vpop.f32.mrb[0].mxu0
    %v113 = vadd.f32 %v55, %v112
    %v114 = vpop.f32.mrb[0].mxu0
    %v115 = vpop.f32.mrb[0].mxu0
    %v116 = vadd.f32 %v55, %v115
    %v117 = vpop.f32.mrb[0].mxu0
    %118 = vdwg.mxu0
    %119 = vmax.xlane.f32.xlu0 %v113
    %v120 = vpop.xlane.xlu0 %119
    %121 = vmax.xlane.f32.xlu0 %v116
    %v122 = vpop.xlane.xlu0 %121
    %v123 = vsub.f32 %v113, %v120
    %v124 = vsub.f32 %v116, %v122
    %v125 = vmul.f32 %v123, 1.442695
    %v126 = vpow.pop %v125
    %v127 = vmul.f32 %v124, 1.442695
    %v128 = vpow.pop %v127
    %129 = vadd.xlane.f32.xlu0 %v126
    %v130 = vpop.xlane.xlu0 %129
    %131 = vadd.xlane.f32.xlu0 %v128
    %v132 = vpop.xlane.xlu0 %131
    %v133 = vlog2.pop %v130
    %v134 = vmul.f32 %v133, 0.6931472
    %v135 = vlog2.pop %v132
    %v136 = vmul.f32 %v135, 0.6931472
    %v137 = vsub.f32 %v123, %v134
    %v138 = vsub.f32 %v124, %v136
    %139 = vst [vmem:[#allocation7] sm:$0xff] %v137
    %140 = vst [vmem:[#allocation7 + $0x8] sm:$0xff] %v138
    // Predicated region
    $region22: #{tpu_custom_call.1} parent=1 // pred_check
      _
    $region23: #{tpu_custom_call.1} parent=1 // pred_check_branch
      %142 = sbr.rel (0) target = $region25
    $region24: #{tpu_custom_call.1} parent=1 // pred_region
      %s144 = ssub.s32 256, 256
      %145 = vsyncadd [#allocation4], %s144
      %s146 = sshll.u32 [#allocation7], 4
      %s147 = int_to_ptr.vmem [resolvable:$true] %s146
      %152 = dma.vmem_to_hbm [thread:$0]  %s147, 256, %s3, [#allocation4], 128, 128, 8
    $region25: #{tpu_custom_call.1} parent=1 // pred_fallthru
      _
    // Predicated region
    $region26: #{tpu_custom_call.1} parent=1 // pred_check
      _
    $region27: #{tpu_custom_call.1} parent=1 // pred_check_branch
      %154 = sbr.rel (0) target = $region29
    $region28: #{tpu_custom_call.1} parent=1 // pred_region
      %155 = dma.done [#allocation4], 256
    $region29: #{tpu_custom_call.1} parent=1 // pred_fallthru
      _
    %156 = vsyncpa [#allocation3], 1
    %157 = vsyncpa [#allocation6], 1
    %158 = vsyncpa [#allocation4], 1

</llo_original>
